<compile_context>
chip_gen: v7x
topology: tpu7x:2x2x1
jax: 0.10.0
libtpu: 0.0.40
codegen_flags: <defaults>
</compile_context>

<pallas_src>
import jax
import jax.numpy as jnp
from jax.experimental import pallas as pl
from jax.experimental.pallas import tpu as pltpu


def fam_kernel(x_ref, o_ref):
    # Block shape: (bB, C, T, s_tile); T on sublanes, spatial (W*H) on lanes.
    x = x_ref[...]                              # stays in input dtype (no f32 copy)
    _, C, T, _ = x.shape

    # Per-pixel channel mean, accumulated in f32 from per-channel slices so the
    # big tensor is never duplicated at f32 width (matters for bf16 inputs).
    m = x[:, 0].astype(jnp.float32)
    for c in range(1, C):
        m = m + x[:, c].astype(jnp.float32)
    m = m / C                                   # (bB, T, s_tile), f32

    # m_next[t] = m[t+1]; static-shift roll touches only the tiny mean map.
    # The wrapped last row is masked out below.
    m_next = jnp.roll(m, shift=-1, axis=1)
    att = jax.nn.sigmoid(jnp.abs(m_next - m))   # exp/logistic -> EUP slot

    # Last frame passes through unmodified -> attention == 1 on row T-1.
    t_idx = jax.lax.broadcasted_iota(jnp.int32, att.shape, 1)
    att = jnp.where(t_idx == T - 1, 1.0, att)

    # Single full-block, lane-dense store; multiply in the input dtype.
    o_ref[...] = x * att[:, None, :, :].astype(x.dtype)


def _block_target_bytes():
    """Per-block byte target, chosen per TPU generation (best effort)."""
    target = 4 << 20                          # safe on v7x (64 MiB physical VMEM)
    try:
        if int(pltpu.get_tpu_info().vmem_capacity_bytes) >= (100 << 20):
            target = 6 << 20                  # v5e / v6e: 128 MiB physical VMEM
    except Exception:
        pass
    return target


def _choose_tiling(B, C, T, S_pad, itemsize, target_bytes):
    """Pick (batch_block, spatial_tile): lane-dense, byte-bounded, >= 2 grid steps."""
    col_bytes = C * T * itemsize              # bytes per batch row per lane column
    cands = [d for d in range(128, S_pad + 1, 128) if S_pad % d == 0]
    s_tile = cands[0]
    for cand in cands:                        # largest lane-dense divisor in budget
        if cand * col_bytes <= target_bytes:
            s_tile = cand
    # Merge batch rows when a single (C, T, s_tile) slab is small, so each grid
    # step still moves ~target bytes (amortizes the fixed per-step cost).
    bB = 1
    for d in range(1, B + 1):
        if B % d == 0 and d * s_tile * col_bytes <= target_bytes:
            bB = d
    # Guarantee >= 2 parallel grid iterations when possible (v7x has 2 TCs).
    if (B // bB) * (S_pad // s_tile) < 2:
        if bB > 1:
            bB = max(d for d in range(1, B) if B % d == 0)
        else:
            smaller = [c for c in cands if c <= S_pad // 2]
            if smaller:
                s_tile = smaller[-1]
    return bB, s_tile


def fam_pallas(x_nctwh, *, target_block_bytes=None):
    """FAM forward on a (B, C, T, W, H) video tensor (PyTorch NCTWH layout)."""
    B, C, T, W, H = x_nctwh.shape
    if T == 1:
        # No neighbouring frame: output == input (matches the PyTorch module).
        return x_nctwh

    S = W * H
    # Free reshape (merges trailing contiguous dims) -- no transpose needed.
    x = x_nctwh.reshape(B, C, T, S)

    # Bounded lane-dense tiling: pad the spatial axis to a multiple of 128 so
    # blocks are never sized by the raw (possibly huge / odd) spatial extent.
    S_pad = ((S + 127) // 128) * 128
    if S_pad != S:
        x = jnp.pad(x, ((0, 0), (0, 0), (0, 0), (0, S_pad - S)))

    if target_block_bytes is None:
        target_block_bytes = _block_target_bytes()

    itemsize = x.dtype.itemsize
    bB, s_tile = _choose_tiling(B, C, T, S_pad, itemsize, target_block_bytes)

    # Explicit scoped-VMEM budget: double-buffered in + out blocks plus the
    # small f32 mean/attention temporaries, with headroom; capped under 48 MiB
    # so it is always safe on v7x's 64 MiB physical VMEM.
    block_bytes = bB * C * T * s_tile * itemsize
    att_bytes = bB * T * s_tile * 4
    vmem_limit = int(min(max(4 * block_bytes + 8 * att_bytes + (4 << 20),
                             32 << 20),
                         48 << 20))

    spec = pl.BlockSpec((bB, C, T, s_tile), lambda b, s: (b, 0, 0, s))

    cost = pl.CostEstimate(
        flops=int(3 * B * C * T * S_pad),
        transcendentals=int(B * T * S_pad),
        bytes_accessed=int(2 * B * C * T * S_pad * itemsize),
    )

    y = pl.pallas_call(
        fam_kernel,
        out_shape=jax.ShapeDtypeStruct((B, C, T, S_pad), x.dtype),
        grid_spec=pltpu.PrefetchScalarGridSpec(
            num_scalar_prefetch=0,
            grid=(B // bB, S_pad // s_tile),
            in_specs=[spec],
            out_specs=spec,
        ),
        compiler_params=pltpu.CompilerParams(
            dimension_semantics=("parallel", "parallel"),
            vmem_limit_bytes=vmem_limit,
        ),
        cost_estimate=cost,
    )(x)

    if S_pad != S:
        y = y[..., :S]
    return y.reshape(B, C, T, W, H)


def fam_reference(x_nctwh):
    """Pure-JAX reference mirroring the PyTorch FAM module."""
    x = jnp.transpose(x_nctwh, (0, 2, 1, 3, 4))      # (B, T, C, W, H)
    C = x.shape[2]
    o1 = x[:, :-1]
    o2 = x[:, 1:]
    m1 = jnp.sum(o1, axis=2) / C
    m2 = jnp.sum(o2, axis=2) / C
    att = jax.nn.sigmoid(jnp.abs(m2 - m1))[:, :, None]        # (B, T-1, 1, W, H)
    out = jnp.concatenate([o1 * att, x[:, -1:]], axis=1)
    return jnp.transpose(out, (0, 2, 1, 3, 4))


def _check(x):
    y = fam_pallas(x)
    jax.block_until_ready(y)
    y_ref = fam_reference(x)
    assert y.shape == x.shape
    assert jnp.allclose(y, y_ref, atol=1e-5, rtol=1e-5), "mismatch vs reference"
    return y


if __name__ == "__main__":
    key = jax.random.PRNGKey(0)
    k0, k1, k2 = jax.random.split(key, 3)

    # Primary shape: (B, C, T, W, H) video clip batch.
    _check(jax.random.normal(k0, (2, 4, 8, 16, 16), dtype=jnp.float32))

    # Non-128-divisible spatial size -> exercises the bounded lane-padding
    # path (no whole-S fallback block).
    _check(jax.random.normal(k1, (2, 4, 8, 10, 10), dtype=jnp.float32))

    # Larger batch -> exercises batch-merged blocks while keeping >= 2
    # parallel grid steps.
    _check(jax.random.normal(k2, (4, 4, 8, 16, 16), dtype=jnp.float32))

    print("KERNEL_OK")
</pallas_src>

<mosaic_0001>
module attributes {stable_mosaic.version = 11 : i64} {
  func.func @fam_kernel(%arg0: i32, %arg1: i32, %arg2: memref<1x4x8x256xf32, #tpu.memory_space<vmem>>, %arg3: memref<1x4x8x256xf32, #tpu.memory_space<vmem>>) attributes {dimension_semantics = [#tpu.dimension_semantics<parallel>, #tpu.dimension_semantics<parallel>], iteration_bounds = array<i64: 2, 1>, scalar_prefetch = 0 : i64, scratch_operands = 0 : i64, tpu.core_type = #tpu.core_type<tc>, window_params = [{transform_indices = @transform_0, window_bounds = array<i64: 1, 4, 8, 256>}, {transform_indices = @transform_1, window_bounds = array<i64: 1, 4, 8, 256>}]} {
    %c0 = arith.constant 0 : index
    %c0_0 = arith.constant 0 : index
    %c0_1 = arith.constant 0 : index
    %c0_2 = arith.constant 0 : index
    %0 = vector.load %arg2[%c0, %c0_0, %c0_1, %c0_2] : memref<1x4x8x256xf32, #tpu.memory_space<vmem>>, vector<1x4x8x256xf32>
    %1 = vector.extract_strided_slice %0 {offsets = [0, 0, 0, 0], sizes = [1, 1, 8, 256], strides = [1, 1, 1, 1]} : vector<1x4x8x256xf32> to vector<1x1x8x256xf32>
    %2 = vector.shape_cast %1 : vector<1x1x8x256xf32> to vector<1x8x256xf32>
    %3 = vector.extract_strided_slice %0 {offsets = [0, 1, 0, 0], sizes = [1, 1, 8, 256], strides = [1, 1, 1, 1]} : vector<1x4x8x256xf32> to vector<1x1x8x256xf32>
    %4 = vector.shape_cast %3 : vector<1x1x8x256xf32> to vector<1x8x256xf32>
    %5 = arith.addf %2, %4 : vector<1x8x256xf32>
    %6 = vector.extract_strided_slice %0 {offsets = [0, 2, 0, 0], sizes = [1, 1, 8, 256], strides = [1, 1, 1, 1]} : vector<1x4x8x256xf32> to vector<1x1x8x256xf32>
    %7 = vector.shape_cast %6 : vector<1x1x8x256xf32> to vector<1x8x256xf32>
    %8 = arith.addf %5, %7 : vector<1x8x256xf32>
    %9 = vector.extract_strided_slice %0 {offsets = [0, 3, 0, 0], sizes = [1, 1, 8, 256], strides = [1, 1, 1, 1]} : vector<1x4x8x256xf32> to vector<1x1x8x256xf32>
    %10 = vector.shape_cast %9 : vector<1x1x8x256xf32> to vector<1x8x256xf32>
    %11 = arith.addf %8, %10 : vector<1x8x256xf32>
    %cst = arith.constant 4.000000e+00 : f32
    %12 = vector.broadcast %cst : f32 to vector<1x8x256xf32>
    %13 = arith.divf %11, %12 : vector<1x8x256xf32>
    %14 = vector.extract_strided_slice %13 {offsets = [0, 1, 0], sizes = [1, 7, 256], strides = [1, 1, 1]} : vector<1x8x256xf32> to vector<1x7x256xf32>
    %15 = vector.extract_strided_slice %13 {offsets = [0, 0, 0], sizes = [1, 1, 256], strides = [1, 1, 1]} : vector<1x8x256xf32> to vector<1x1x256xf32>
    %16 = tpu.concatenate %14, %15 in 1 : vector<1x7x256xf32>, vector<1x1x256xf32> -> vector<1x8x256xf32>
    %17 = arith.subf %16, %13 : vector<1x8x256xf32>
    %18 = math.absf %17 : vector<1x8x256xf32>
    %19 = arith.negf %18 : vector<1x8x256xf32>
    %20 = math.exp %19 : vector<1x8x256xf32>
    %cst_3 = arith.constant 1.000000e+00 : f32
    %21 = vector.broadcast %cst_3 : f32 to vector<1x8x256xf32>
    %22 = arith.addf %21, %20 : vector<1x8x256xf32>
    %23 = arith.divf %21, %22 : vector<1x8x256xf32>
    %24 = tpu.iota {dimensions = array<i32: 1>} : vector<1x8x256xi32>
    %c7_i32 = arith.constant 7 : i32
    %25 = vector.broadcast %c7_i32 : i32 to vector<1x8x256xi32>
    %26 = arith.cmpi eq, %24, %25 : vector<1x8x256xi32>
    %cst_4 = arith.constant 1.000000e+00 : f32
    %27 = vector.broadcast %cst_4 : f32 to vector<1x8x256xf32>
    %28 = arith.select %26, %27, %23 : vector<1x8x256xi1>, vector<1x8x256xf32>
    %29 = vector.shape_cast %28 : vector<1x8x256xf32> to vector<1x1x8x256xf32>
    %30 = vector.broadcast %29 : vector<1x1x8x256xf32> to vector<1x4x8x256xf32>
    %31 = arith.mulf %0, %30 : vector<1x4x8x256xf32>
    %c0_5 = arith.constant 0 : index
    %c0_6 = arith.constant 0 : index
    %c0_7 = arith.constant 0 : index
    %c0_8 = arith.constant 0 : index
    %32 = vector.load %arg3[%c0_5, %c0_6, %c0_7, %c0_8] : memref<1x4x8x256xf32, #tpu.memory_space<vmem>>, vector<1x4x8x256xf32>
    tpu.vector_store %arg3[%c0_5, %c0_6, %c0_7, %c0_8], %31 {strides = array<i32>} : memref<1x4x8x256xf32, #tpu.memory_space<vmem>>, vector<1x4x8x256xf32>,
    return
  }
  func.func @transform_0(%arg0: i32, %arg1: i32) -> (i32, i32, i32, i32) {
    %c0_i32 = arith.constant 0 : i32
    %c0_i32_0 = arith.constant 0 : i32
    %c0_i32_1 = arith.constant 0 : i32
    return %arg0, %c0_i32, %c0_i32_0, %arg1 : i32, i32, i32, i32
  }
  func.func @transform_1(%arg0: i32, %arg1: i32) -> (i32, i32, i32, i32) {
    %c0_i32 = arith.constant 0 : i32
    %c0_i32_0 = arith.constant 0 : i32
    %c0_i32_1 = arith.constant 0 : i32
    return %arg0, %c0_i32, %c0_i32_0, %arg1 : i32, i32, i32, i32
  }
}

</mosaic_0001>

<llo_original>
// kernel: tpu_custom_call.1
$region0: #{tpu_custom_call.1}
  #allocation0 [shape = 'u32[]', space=smem, size = 0x4, offset = 0x4, fixed_abs, tag = 'smem constant byte address 0x4 - core index']
  #allocation1 [shape = 'u32[144,128]{1,0:T(1,128)}', space=vmem, size = 0x12000, scoped, tag = 'internal scratch']
  %s0 = inlined_call_operand.hbm [shape: f32[2,4,8,256], index: 0, kind: input, shape index: {}]
  %s1 = inlined_call_operand.hbm [shape: f32[2,4,8,256], index: 1, kind: output, shape index: {}]
  %s2 = sld [smem:[#allocation0]]
  $region41: #{tpu_custom_call.1} parent=0
    _
  %s4 = ssub.s32 1, %s2
  %s5 = scalar_select 0, %s4, %s2
  $region1: #{tpu_custom_call.1} parent=0
    #allocation2 [shape = 'u8[65536]{0}', space=vmem, size = 0x10000, scoped, tag = 'input window, operand 0']
    #allocation3 [shape = 's32[2]{0}', space=sflag, size = 0x8, scoped, tag = 'scoped memory for tpu_custom_call.1']
    #allocation4 [shape = 's32[2]{0}', space=sflag, size = 0x8, scoped, tag = 'scoped memory for tpu_custom_call.1']
    #allocation5 [shape = 'u8[65536]{0}', space=vmem, size = 0x10000, scoped, tag = 'output window, operand 0']
    %6 = vsyncpa [#allocation3], 0
    %s7 = scalar_lea.sflag [#allocation3], 1
    %8 = vsyncpa %s7, 0
    %9 = vsyncpa [#allocation4], 0
    %s10 = scalar_lea.sflag [#allocation4], 1
    %11 = vsyncpa %s10, 0
    loop: start=0, step=1, limit=4
    $region2: #{tpu_custom_call.1} parent=1 // loop_pre_header
      _
    $region3: #{tpu_custom_call.1} parent=1 // loop_header
      %s13 = sphi 0, %s17
      %p14 = scmp.ge.s32.totalorder %s13, 4
      %s20 = sphi 0, %s32
      %s21 = sphi 0, %s28
      %s22 = sphi 0, %s20
      %s23 = sphi 0, %s21
      %s24 = sphi 0, %s22
      %s25 = sphi 0, %s23
      %s37 = sphi 0, %s39
      %s40 = sphi 0, %s37
      %s41 = sphi 0, %s40
      %s57 = sphi 0, %s41
      %s65 = sphi 0, %s67
      %s68 = sphi 0, %s65
      %s69 = sphi 0, %s68
      %s85 = sphi 0, %s69
    $region4: #{tpu_custom_call.1} parent=1 // loop_header_branch
      %16 = sbr.rel (%p14) target = $region8
    $region5: #{tpu_custom_call.1} parent=1 // loop_body
      %s18 = ssub.s32 %s13, 1
      %s19 = ssub.s32 %s13, 2
      %s26 = sadd.s32 1, %s21
      %p27 = scmp.ge.s32.totalorder %s26, 1
      %s28 = scalar_select %p27, 0, %s26
      %s29 = sadd.s32 1, %s20
      %s30 = scalar_select %p27, %s29, %s20
      %p31 = scmp.ge.s32.totalorder %s30, 2
      %s32 = scalar_select %p31, 0, %s30
      %s33 = ssub.s32 %s20, %s32
      %s34 = ssub.s32 %s21, %s28
      %s35 = sor.u32 %s33, %s34
      %p36 = scmp.eq.s32.totalorder %s35, 0
      %s38 = sadd.s32 %s37, 1
      %s39 = scalar_select %p36, %s37, %s38
      %p42 = pneg %p36
      %p43 = scmp.eq.s32.totalorder %s13, 1
      %p44 = por %p42, %p43
      %p45 = scmp.ne.s32.totalorder %s37, %s40
      %p46 = scmp.eq.s32.totalorder %s13, 0
      %p47 = por %p45, %p46
      %p48 = scmp.ne.s32.totalorder %s37, %s40
      %p49 = scmp.eq.s32.totalorder %s18, 1
      %p50 = por %p48, %p49
      %p51 = scmp.ne.s32.totalorder %s40, %s41
      %p52 = scmp.eq.s32.totalorder %s18, 0
      %p53 = por %p51, %p52
      %p54 = scmp.ne.s32.totalorder %s40, %s41
      %p55 = scmp.eq.s32.totalorder %s19, 1
      %p56 = por %p54, %p55
      %p58 = scmp.ne.s32.totalorder %s41, %s57
      %p59 = scmp.eq.s32.totalorder %s19, 0
      %p60 = por %p58, %p59
      %s61 = ssub.s32 %s20, %s32
      %s62 = ssub.s32 %s21, %s28
      %s63 = sor.u32 %s61, %s62
      %p64 = scmp.eq.s32.totalorder %s63, 0
      %s66 = sadd.s32 %s65, 1
      %s67 = scalar_select %p64, %s65, %s66
      %p70 = pneg %p64
      %p71 = scmp.eq.s32.totalorder %s13, 1
      %p72 = por %p70, %p71
      %p73 = scmp.ne.s32.totalorder %s65, %s68
      %p74 = scmp.eq.s32.totalorder %s13, 0
      %p75 = por %p73, %p74
      %p76 = scmp.ne.s32.totalorder %s65, %s68
      %p77 = scmp.eq.s32.totalorder %s18, 1
      %p78 = por %p76, %p77
      %p79 = scmp.ne.s32.totalorder %s68, %s69
      %p80 = scmp.eq.s32.totalorder %s18, 0
      %p81 = por %p79, %p80
      %p82 = scmp.ne.s32.totalorder %s68, %s69
      %p83 = scmp.eq.s32.totalorder %s19, 1
      %p84 = por %p82, %p83
      %p86 = scmp.ne.s32.totalorder %s69, %s85
      %p87 = scmp.eq.s32.totalorder %s19, 0
      %p88 = por %p86, %p87
      %p89 = scmp.le.s32.totalorder 1, %s13
      %p90 = scmp.lt.s32.totalorder %s13, 3
      %p91 = pnand %p89, %p90
      %p92 = pneg %p91
      // Predicated region
      $region9: #{tpu_custom_call.1} parent=5 // pred_check
        _
      $region10: #{tpu_custom_call.1} parent=5 // pred_check_branch
        %94 = sbr.rel (%p91) target = $region12
      $region11: #{tpu_custom_call.1} parent=5 // pred_region
        %s95 = ssub.s32 %s13, 1
      $region12: #{tpu_custom_call.1} parent=5 // pred_fallthru
        _
      %p96 = scmp.lt.s32.totalorder %s13, 2
      // Predicated region
      $region13: #{tpu_custom_call.1} parent=5 // pred_check
        %p97 = pneg %p96
      $region14: #{tpu_custom_call.1} parent=5 // pred_check_branch
        %99 = sbr.rel (%p97) target = $region16
      $region15: #{tpu_custom_call.1} parent=5 // pred_region
        // Predicated region
        $region17: #{tpu_custom_call.1} parent=15 // pred_check
          %p100 = pneg %p47
        $region18: #{tpu_custom_call.1} parent=15 // pred_check_branch
          %102 = sbr.rel (%p100) target = $region20
        $region19: #{tpu_custom_call.1} parent=15 // pred_region
          %s103 = sand.u32 %s37, 1
          %s104 = scalar_lea.sflag [#allocation3], %s103
          %s105 = sand.u32 %s37, 1
          %s106 = smul.addr %s105, 64
          %s107 = scalar_lea.vmem [#allocation2], %s106
          %s108 = smul.u32 2, %s21
          %s110 = ssub.s32 1024, 1024
          %111 = vsyncadd %s104, %s110
          %s112 = smul.addr %s20, 8
          %s113 = sadd.s32 %s108, %s112
          %s114 = smul.addr %s113, 128
          %s115 = scalar_lea.hbm %s0, %s114
          %s116 = sshll.u32 %s107, 4
          %s117 = int_to_ptr.vmem [resolvable:$true] %s116
          %122 = dma.hbm_to_vmem [thread:$0]  %s115, 1024, %s117, %s104, 256, 256, 16
        $region20: #{tpu_custom_call.1} parent=15 // pred_fallthru
          _
      $region16: #{tpu_custom_call.1} parent=5 // pred_fallthru
        _
      %p123 = scmp.le.s32.totalorder 1, %s13
      %p124 = scmp.lt.s32.totalorder %s13, 3
      %p125 = pnand %p123, %p124
      %p126 = pneg %p125
      // Predicated region
      $region21: #{tpu_custom_call.1} parent=5 // pred_check
        _
      $region22: #{tpu_custom_call.1} parent=5 // pred_check_branch
        %128 = sbr.rel (%p125) target = $region24
      $region23: #{tpu_custom_call.1} parent=5 // pred_region
        %s129 = ssub.s32 %s13, 1
        %s130 = sand.u32 %s40, 1
        %s131 = scalar_lea.sflag [#allocation3], %s130
        %s132 = sand.u32 %s40, 1
        %s133 = smul.addr %s132, 64
        %s134 = scalar_lea.vmem [#allocation2], %s133
        // Predicated region
        $region25: #{tpu_custom_call.1} parent=23 // pred_check
          %p135 = pneg %p53
        $region26: #{tpu_custom_call.1} parent=23 // pred_check_branch
          %137 = sbr.rel (%p135) target = $region28
        $region27: #{tpu_custom_call.1} parent=23 // pred_region
          %138 = dma.done %s131, 1024
        $region28: #{tpu_custom_call.1} parent=23 // pred_fallthru
          _
        %s139 = sand.u32 %s40, 1
        %s140 = scalar_lea.sflag [#allocation3], %s139
        %s141 = sand.u32 %s40, 1
        %s142 = smul.addr %s141, 64
        %s143 = scalar_lea.vmem [#allocation2], %s142
        %p144 = pneg %p53
        %p145 = pneg %p50
        %p146 = pneg %p81
        %p147 = pneg %p78
        %s148 = sand.u32 %s68, 1
        %s149 = scalar_lea.sflag [#allocation4], %s148
        %s150 = sand.u32 %s68, 1
        %s151 = smul.addr %s150, 64
        %s152 = scalar_lea.vmem [#allocation5], %s151
        %s153 = smul.u32 2, %s23
        %s154 = smul.u32 2, %s23
        %v155 = vld [vmem:[%s134] sm:$0xff]
        %v156 = vld [vmem:[%s134 + $0x8] sm:$0xff]
        %v157 = vld [vmem:[%s134 + $0x10] sm:$0xff]
        %v158 = vld [vmem:[%s134 + $0x18] sm:$0xff]
        %v159 = vld [vmem:[%s134 + $0x20] sm:$0xff]
        %v160 = vld [vmem:[%s134 + $0x28] sm:$0xff]
        %v161 = vld [vmem:[%s134 + $0x30] sm:$0xff]
        %v162 = vld [vmem:[%s134 + $0x38] sm:$0xff]
        %v163 = vadd.f32 %v155, %v157
        %v164 = vadd.f32 %v156, %v158
        %v165 = vadd.f32 %v163, %v159
        %v166 = vadd.f32 %v164, %v160
        %v167 = vadd.f32 %v165, %v161
        %v168 = vadd.f32 %v166, %v162
        %v169 = vrcp.pop 4.0
        %v170 = vmul.f32 %v167, %v169
        %v171 = vmul.f32 %v168, %v169
        %v174 = vrot.slane %v170, 1
        %v175 = vrot.slane %v171, 1
        %vm178 = vcmask 1046528
        %v179 = vsel %vm178, %v174, %v174
        %v180 = vsel %vm178, %v175, %v175
        %v181 = vsub.f32 %v179, %v170
        %v182 = vsub.f32 %v180, %v171
        %v183 = vand.u32 2147483647, %v181
        %v184 = vand.u32 2147483647, %v182
        %v185 = vxor.u32 %v183, 2147483648
        %v186 = vxor.u32 %v184, 2147483648
        %v187 = vmul.f32 %v185, 1.442695
        %v188 = vpow.pop %v187
        %v189 = vmul.f32 %v186, 1.442695
        %v190 = vpow.pop %v189
        %v191 = vadd.f32 %v188, 1.0
        %v192 = vadd.f32 %v190, 1.0
        %v193 = vrcp.pop %v191
        %v194 = vmul.f32 1.0, %v193
        %v195 = vrcp.pop %v192
        %v196 = vmul.f32 1.0, %v195
        %v197 = vlaneseq
        %v198 = vshrl.u32 %v197, 7
        %vm199 = vcmp.eq.s32.totalorder %v198, 7
        %v200 = vsel %vm199, 1.0, %v194
        %v201 = vsel %vm199, 1.0, %v196
        %v202 = vmul.f32 %v155, %v200
        %v203 = vmul.f32 %v156, %v201
        %v204 = vmul.f32 %v157, %v200
        %v205 = vmul.f32 %v158, %v201
        %v206 = vmul.f32 %v159, %v200
        %v207 = vmul.f32 %v160, %v201
        %v208 = vmul.f32 %v161, %v200
        %v209 = vmul.f32 %v162, %v201
        %210 = vst [vmem:[%s152] sm:$0xff] %v202
        %211 = vst [vmem:[%s152 + $0x8] sm:$0xff] %v203
        %212 = vst [vmem:[%s152 + $0x10] sm:$0xff] %v204
        %213 = vst [vmem:[%s152 + $0x18] sm:$0xff] %v205
        %214 = vst [vmem:[%s152 + $0x20] sm:$0xff] %v206
        %215 = vst [vmem:[%s152 + $0x28] sm:$0xff] %v207
        %216 = vst [vmem:[%s152 + $0x30] sm:$0xff] %v208
        %217 = vst [vmem:[%s152 + $0x38] sm:$0xff] %v209
        %s218 = sand.u32 %s68, 1
        %s219 = scalar_lea.sflag [#allocation4], %s218
        %s220 = sand.u32 %s68, 1
        %s221 = smul.addr %s220, 64
        %s222 = scalar_lea.vmem [#allocation5], %s221
        // Predicated region
        $region29: #{tpu_custom_call.1} parent=23 // pred_check
          %p223 = pneg %p78
        $region30: #{tpu_custom_call.1} parent=23 // pred_check_branch
          %225 = sbr.rel (%p223) target = $region32
        $region31: #{tpu_custom_call.1} parent=23 // pred_region
          %s226 = smul.u32 2, %s23
          %s228 = ssub.s32 1024, 1024
          %229 = vsyncadd %s219, %s228
          %s230 = smul.addr %s22, 8
          %s231 = sadd.s32 %s226, %s230
          %s232 = smul.addr %s231, 128
          %s233 = scalar_lea.hbm %s1, %s232
          %s234 = sshll.u32 %s222, 4
          %s235 = int_to_ptr.vmem [resolvable:$true] %s234
          %240 = dma.vmem_to_hbm [thread:$0]  %s235, 1024, %s233, %s219, 256, 256, 16
        $region32: #{tpu_custom_call.1} parent=23 // pred_fallthru
          _
      $region24: #{tpu_custom_call.1} parent=5 // pred_fallthru
        _
      %p241 = scmp.le.s32.totalorder 2, %s13
      // Predicated region
      $region33: #{tpu_custom_call.1} parent=5 // pred_check
        %p242 = pneg %p241
      $region34: #{tpu_custom_call.1} parent=5 // pred_check_branch
        %244 = sbr.rel (%p242) target = $region36
      $region35: #{tpu_custom_call.1} parent=5 // pred_region
        %s245 = ssub.s32 %s13, 2
        // Predicated region
        $region37: #{tpu_custom_call.1} parent=35 // pred_check
          %p246 = pneg %p84
        $region38: #{tpu_custom_call.1} parent=35 // pred_check_branch
          %248 = sbr.rel (%p246) target = $region40
        $region39: #{tpu_custom_call.1} parent=35 // pred_region
          %s249 = sand.u32 %s69, 1
          %s250 = scalar_lea.sflag [#allocation4], %s249
          %s251 = sand.u32 %s69, 1
          %s252 = smul.addr %s251, 64
          %s253 = scalar_lea.vmem [#allocation5], %s252
          %254 = dma.done %s250, 1024
        $region40: #{tpu_custom_call.1} parent=35 // pred_fallthru
          _
      $region36: #{tpu_custom_call.1} parent=5 // pred_fallthru
        _
    $region6: #{tpu_custom_call.1} parent=1 // loop_footer
      %s17 = sadd.s32 1, %s13
    $region7: #{tpu_custom_call.1} parent=1 // loop_footer_branch
      %12 = sbr.rel target = $region3
    $region8: #{tpu_custom_call.1} parent=1 // loop_exit
      _
    %255 = vsyncpa [#allocation3], 1
    %s256 = scalar_lea.sflag [#allocation3], 1
    %257 = vsyncpa %s256, 1
    %258 = vsyncpa [#allocation4], 1
    %s259 = scalar_lea.sflag [#allocation4], 1
    %260 = vsyncpa %s259, 1

</llo_original>
